<compile_context>
chip_gen: v7x
topology: tpu7x:2x2x1
jax: 0.10.0
libtpu: 0.0.40
codegen_flags: <defaults>
</compile_context>

<pallas_src>
import functools

import jax
import jax.numpy as jnp
from jax import lax
from jax.experimental import pallas as pl
from jax.experimental.pallas import tpu as pltpu


def _make_conv_kernel(tH, W, C):
    """3x3 conv over a tH-row tile: in-kernel im2col + one MXU matmul."""
    tHW = tH * W

    def kernel(x_ref, w_ref, o_ref, patch_ref):
        # x_ref:     (1, H+2, W+2, C)  full padded image (resident per batch)
        # w_ref:     (9*C, OCp)        3x3 taps folded into the contraction dim
        # o_ref:     (1, tH*W, OCp)    flattened, lane-dense output tile
        # patch_ref: (tH*W, 9*C)       VMEM scratch holding the im2col patch
        h_blk = pl.program_id(1)
        row0 = h_blk * tH
        for dy in range(3):
            slab = x_ref[0, pl.ds(row0 + dy, tH), :, :]        # (tH, W+2, C)
            for dx in range(3):
                col = (dy * 3 + dx) * C
                patch_ref[:, col:col + C] = (
                    slab[:, dx:dx + W, :].reshape(tHW, C))
        # single K = 9*C matmul on the MXU, f32 accumulation
        o_ref[0] = jnp.dot(
            patch_ref[...], w_ref[...],
            preferred_element_type=jnp.float32).astype(o_ref.dtype)

    return kernel


def _pick_tile_rows(H, W, OCp, bytes_per_elem=4, tile_budget=8 * 1024 * 1024):
    # Largest row-tile tH dividing H whose f32 output tile fits the budget and
    # keeps the output block sublane-friendly ((tH*W) % 8 == 0, or full H).
    candidates = [t for t in range(1, H + 1)
                  if H % t == 0 and (t == H or (t * W) % 8 == 0)]
    fitting = [t for t in candidates
               if t * W * OCp * bytes_per_elem <= tile_budget]
    return max(fitting) if fitting else min(candidates)


def conv3x3_pallas(x_pad, w9c, tile_rows=None):
    # x_pad: (B, H+2, W+2, C) zero-padded NHWC input; w9c: (9*C, OCp)
    B, Hp2, Wp2, C = x_pad.shape
    H, W = Hp2 - 2, Wp2 - 2
    K, OCp = w9c.shape
    assert K == 9 * C
    tH = tile_rows if tile_rows is not None else _pick_tile_rows(H, W, OCp)
    assert H % tH == 0 and (tH == H or (tH * W) % 8 == 0)
    nH = H // tH

    kernel = _make_conv_kernel(tH, W, C)
    return pl.pallas_call(
        kernel,
        out_shape=jax.ShapeDtypeStruct((B, H * W, OCp), x_pad.dtype),
        grid_spec=pltpu.PrefetchScalarGridSpec(
            num_scalar_prefetch=0,
            grid=(B, nH),
            in_specs=[
                # full padded image per batch; index_map ignores the row tile,
                # so it stays resident in VMEM across the inner grid axis.
                pl.BlockSpec((1, Hp2, Wp2, C), lambda b, h: (b, 0, 0, 0)),
                # constant-index weight (small; kept whole in VMEM).
                pl.BlockSpec((9 * C, OCp), lambda b, h: (0, 0)),
            ],
            # flattened (rows = h*W + w), lane-dense output tile
            out_specs=pl.BlockSpec((1, tH * W, OCp), lambda b, h: (b, h, 0)),
            scratch_shapes=[pltpu.VMEM((tH * W, 9 * C), jnp.float32)],
        ),
        compiler_params=pltpu.CompilerParams(
            dimension_semantics=("parallel", "parallel"),
            vmem_limit_bytes=48 * 1024 * 1024),
    )(x_pad, w9c)


def upsample_x4(x_nchw, w_oihw, tile_rows=None):
    # x_nchw: (B, C, H, W); w_oihw: (16C, C, 3, 3)  (PyTorch conv weight layout)
    B, C, H, W = x_nchw.shape
    OC = w_oihw.shape[0]
    assert OC == 16 * C and w_oihw.shape[1] == C

    # NCHW -> NHWC, zero-pad spatial dims by 1 (padding=1 in the conv).
    x_nhwc = jnp.transpose(x_nchw, (0, 2, 3, 1))
    x_pad = jnp.pad(x_nhwc, ((0, 0), (1, 1), (1, 1), (0, 0)))

    # OIHW -> HWIO -> (9*C, OC); pad OC to a multiple of 128 for lane-dense
    # stores in the kernel (zero columns, sliced off below).
    w_hwio = jnp.transpose(w_oihw, (2, 3, 1, 0))          # (3, 3, C, OC)
    w9c = w_hwio.reshape(9 * C, OC)
    OCp = ((OC + 127) // 128) * 128
    if OCp != OC:
        w9c = jnp.pad(w9c, ((0, 0), (0, OCp - OC)))

    y = conv3x3_pallas(x_pad, w9c, tile_rows)             # (B, H*W, OCp)

    # PixelShuffle(4): out[b, c, 4h+i, 4w+j] = conv[b, c*16 + i*4 + j, h, w].
    # The slice + reshape + transpose fuse into one XLA copy.
    # TODO(synk): fuse this permutation into the kernel's output write.
    y = y[..., :OC].reshape(B, H, W, C, 4, 4)             # (b, h, w, c, i, j)
    y = jnp.transpose(y, (0, 3, 1, 4, 2, 5))              # (b, c, h, i, w, j)
    return y.reshape(B, C, 4 * H, 4 * W)                  # NCHW output


def upsample_x4_ref(x_nchw, w_oihw):
    # Pure-JAX reference (lax conv + pixel shuffle) for correctness checking.
    y = lax.conv_general_dilated(
        x_nchw, w_oihw, window_strides=(1, 1), padding=((1, 1), (1, 1)),
        dimension_numbers=("NCHW", "OIHW", "NCHW"))
    B, OC, H, W = y.shape
    C = OC // 16
    y = y.reshape(B, C, 4, 4, H, W)
    y = jnp.transpose(y, (0, 1, 4, 2, 5, 3))
    return y.reshape(B, C, 4 * H, 4 * W)


if __name__ == "__main__":
    n_feat = 4
    B, H, W = 2, 16, 16

    key = jax.random.PRNGKey(0)
    kx, kw = jax.random.split(key)
    x = jax.random.normal(kx, (B, n_feat, H, W), dtype=jnp.float32)
    # Conv2d(n_feat, n_feat*16, 3, padding=1, bias=False) weight: (16C, C, 3, 3)
    w = 0.1 * jax.random.normal(kw, (16 * n_feat, n_feat, 3, 3),
                                dtype=jnp.float32)

    ref = upsample_x4_ref(x, w)

    # Exercise the multi-row-tile path (grid = (B, 2)).
    fn_tiled = jax.jit(functools.partial(upsample_x4, tile_rows=8))
    out = jax.block_until_ready(fn_tiled(x, w))
    assert out.shape == (B, n_feat, 4 * H, 4 * W)
    assert jnp.allclose(out, ref, atol=1e-4, rtol=1e-4)

    # Also exercise the auto-tiled path (single row tile at this small size).
    out2 = jax.block_until_ready(jax.jit(upsample_x4)(x, w))
    assert jnp.allclose(out2, ref, atol=1e-4, rtol=1e-4)

    print("KERNEL_OK")
</pallas_src>

<mosaic_0001>
module attributes {stable_mosaic.version = 11 : i64} {
  func.func @kernel(%arg0: i32, %arg1: i32, %arg2: memref<1x18x18x4xf32, #tpu.memory_space<vmem>>, %arg3: memref<36x128xf32, #tpu.memory_space<vmem>>, %arg4: memref<1x128x128xf32, #tpu.memory_space<vmem>>, %arg5: memref<128x36xf32, #tpu.memory_space<vmem>>) attributes {dimension_semantics = [#tpu.dimension_semantics<parallel>, #tpu.dimension_semantics<parallel>], iteration_bounds = array<i64: 2, 2>, scalar_prefetch = 0 : i64, scratch_operands = 1 : i64, tpu.core_type = #tpu.core_type<tc>, window_params = [{transform_indices = @transform_0, window_bounds = array<i64: 1, 18, 18, 4>}, {pipeline_mode = #tpu.pipeline_mode<synchronous>, transform_indices = @transform_1, window_bounds = array<i64: 36, 128>}, {transform_indices = @transform_2, window_bounds = array<i64: 1, 128, 128>}]} {
    %c8_i32 = arith.constant 8 : i32
    %0 = arith.muli %arg1, %c8_i32 : i32
    %c0_i32 = arith.constant 0 : i32
    %1 = arith.addi %0, %c0_i32 : i32
    %c0 = arith.constant 0 : index
    %2 = arith.index_cast %1 : i32 to index
    %c0_0 = arith.constant 0 : index
    %c0_1 = arith.constant 0 : index
    %3 = vector.load %arg2[%c0, %2, %c0_0, %c0_1] : memref<1x18x18x4xf32, #tpu.memory_space<vmem>>, vector<1x8x18x4xf32>
    %4 = vector.shape_cast %3 : vector<1x8x18x4xf32> to vector<8x18x4xf32>
    %5 = vector.extract_strided_slice %4 {offsets = [0, 0, 0], sizes = [8, 16, 4], strides = [1, 1, 1]} : vector<8x18x4xf32> to vector<8x16x4xf32>
    %6 = vector.shape_cast %5 : vector<8x16x4xf32> to vector<128x4xf32>
    %c0_2 = arith.constant 0 : index
    %c0_3 = arith.constant 0 : index
    %7 = vector.load %arg5[%c0_2, %c0_3] : memref<128x36xf32, #tpu.memory_space<vmem>>, vector<128x4xf32>
    tpu.vector_store %arg5[%c0_2, %c0_3], %6 {strides = array<i32>} : memref<128x36xf32, #tpu.memory_space<vmem>>, vector<128x4xf32>,
    %8 = vector.extract_strided_slice %4 {offsets = [0, 1, 0], sizes = [8, 16, 4], strides = [1, 1, 1]} : vector<8x18x4xf32> to vector<8x16x4xf32>
    %9 = vector.shape_cast %8 : vector<8x16x4xf32> to vector<128x4xf32>
    %c0_4 = arith.constant 0 : index
    %c4 = arith.constant 4 : index
    %10 = vector.load %arg5[%c0_4, %c4] : memref<128x36xf32, #tpu.memory_space<vmem>>, vector<128x4xf32>
    tpu.vector_store %arg5[%c0_4, %c4], %9 {strides = array<i32>} : memref<128x36xf32, #tpu.memory_space<vmem>>, vector<128x4xf32>,
    %11 = vector.extract_strided_slice %4 {offsets = [0, 2, 0], sizes = [8, 16, 4], strides = [1, 1, 1]} : vector<8x18x4xf32> to vector<8x16x4xf32>
    %12 = vector.shape_cast %11 : vector<8x16x4xf32> to vector<128x4xf32>
    %c0_5 = arith.constant 0 : index
    %c8 = arith.constant 8 : index
    %13 = vector.load %arg5[%c0_5, %c8] : memref<128x36xf32, #tpu.memory_space<vmem>>, vector<128x4xf32>
    tpu.vector_store %arg5[%c0_5, %c8], %12 {strides = array<i32>} : memref<128x36xf32, #tpu.memory_space<vmem>>, vector<128x4xf32>,
    %c1_i32 = arith.constant 1 : i32
    %14 = arith.addi %0, %c1_i32 : i32
    %c0_6 = arith.constant 0 : index
    %15 = arith.index_cast %14 : i32 to index
    %c0_7 = arith.constant 0 : index
    %c0_8 = arith.constant 0 : index
    %16 = vector.load %arg2[%c0_6, %15, %c0_7, %c0_8] : memref<1x18x18x4xf32, #tpu.memory_space<vmem>>, vector<1x8x18x4xf32>
    %17 = vector.shape_cast %16 : vector<1x8x18x4xf32> to vector<8x18x4xf32>
    %18 = vector.extract_strided_slice %17 {offsets = [0, 0, 0], sizes = [8, 16, 4], strides = [1, 1, 1]} : vector<8x18x4xf32> to vector<8x16x4xf32>
    %19 = vector.shape_cast %18 : vector<8x16x4xf32> to vector<128x4xf32>
    %c0_9 = arith.constant 0 : index
    %c12 = arith.constant 12 : index
    %20 = vector.load %arg5[%c0_9, %c12] : memref<128x36xf32, #tpu.memory_space<vmem>>, vector<128x4xf32>
    tpu.vector_store %arg5[%c0_9, %c12], %19 {strides = array<i32>} : memref<128x36xf32, #tpu.memory_space<vmem>>, vector<128x4xf32>,
    %21 = vector.extract_strided_slice %17 {offsets = [0, 1, 0], sizes = [8, 16, 4], strides = [1, 1, 1]} : vector<8x18x4xf32> to vector<8x16x4xf32>
    %22 = vector.shape_cast %21 : vector<8x16x4xf32> to vector<128x4xf32>
    %c0_10 = arith.constant 0 : index
    %c16 = arith.constant 16 : index
    %23 = vector.load %arg5[%c0_10, %c16] : memref<128x36xf32, #tpu.memory_space<vmem>>, vector<128x4xf32>
    tpu.vector_store %arg5[%c0_10, %c16], %22 {strides = array<i32>} : memref<128x36xf32, #tpu.memory_space<vmem>>, vector<128x4xf32>,
    %24 = vector.extract_strided_slice %17 {offsets = [0, 2, 0], sizes = [8, 16, 4], strides = [1, 1, 1]} : vector<8x18x4xf32> to vector<8x16x4xf32>
    %25 = vector.shape_cast %24 : vector<8x16x4xf32> to vector<128x4xf32>
    %c0_11 = arith.constant 0 : index
    %c20 = arith.constant 20 : index
    %26 = vector.load %arg5[%c0_11, %c20] : memref<128x36xf32, #tpu.memory_space<vmem>>, vector<128x4xf32>
    tpu.vector_store %arg5[%c0_11, %c20], %25 {strides = array<i32>} : memref<128x36xf32, #tpu.memory_space<vmem>>, vector<128x4xf32>,
    %c2_i32 = arith.constant 2 : i32
    %27 = arith.addi %0, %c2_i32 : i32
    %c0_12 = arith.constant 0 : index
    %28 = arith.index_cast %27 : i32 to index
    %c0_13 = arith.constant 0 : index
    %c0_14 = arith.constant 0 : index
    %29 = vector.load %arg2[%c0_12, %28, %c0_13, %c0_14] : memref<1x18x18x4xf32, #tpu.memory_space<vmem>>, vector<1x8x18x4xf32>
    %30 = vector.shape_cast %29 : vector<1x8x18x4xf32> to vector<8x18x4xf32>
    %31 = vector.extract_strided_slice %30 {offsets = [0, 0, 0], sizes = [8, 16, 4], strides = [1, 1, 1]} : vector<8x18x4xf32> to vector<8x16x4xf32>
    %32 = vector.shape_cast %31 : vector<8x16x4xf32> to vector<128x4xf32>
    %c0_15 = arith.constant 0 : index
    %c24 = arith.constant 24 : index
    %33 = vector.load %arg5[%c0_15, %c24] : memref<128x36xf32, #tpu.memory_space<vmem>>, vector<128x4xf32>
    tpu.vector_store %arg5[%c0_15, %c24], %32 {strides = array<i32>} : memref<128x36xf32, #tpu.memory_space<vmem>>, vector<128x4xf32>,
    %34 = vector.extract_strided_slice %30 {offsets = [0, 1, 0], sizes = [8, 16, 4], strides = [1, 1, 1]} : vector<8x18x4xf32> to vector<8x16x4xf32>
    %35 = vector.shape_cast %34 : vector<8x16x4xf32> to vector<128x4xf32>
    %c0_16 = arith.constant 0 : index
    %c28 = arith.constant 28 : index
    %36 = vector.load %arg5[%c0_16, %c28] : memref<128x36xf32, #tpu.memory_space<vmem>>, vector<128x4xf32>
    tpu.vector_store %arg5[%c0_16, %c28], %35 {strides = array<i32>} : memref<128x36xf32, #tpu.memory_space<vmem>>, vector<128x4xf32>,
    %37 = vector.extract_strided_slice %30 {offsets = [0, 2, 0], sizes = [8, 16, 4], strides = [1, 1, 1]} : vector<8x18x4xf32> to vector<8x16x4xf32>
    %38 = vector.shape_cast %37 : vector<8x16x4xf32> to vector<128x4xf32>
    %c0_17 = arith.constant 0 : index
    %c32 = arith.constant 32 : index
    %39 = vector.load %arg5[%c0_17, %c32] : memref<128x36xf32, #tpu.memory_space<vmem>>, vector<128x4xf32>
    tpu.vector_store %arg5[%c0_17, %c32], %38 {strides = array<i32>} : memref<128x36xf32, #tpu.memory_space<vmem>>, vector<128x4xf32>,
    %c0_18 = arith.constant 0 : index
    %c0_19 = arith.constant 0 : index
    %40 = vector.load %arg5[%c0_18, %c0_19] : memref<128x36xf32, #tpu.memory_space<vmem>>, vector<128x36xf32>
    %c0_20 = arith.constant 0 : index
    %c0_21 = arith.constant 0 : index
    %41 = vector.load %arg3[%c0_20, %c0_21] : memref<36x128xf32, #tpu.memory_space<vmem>>, vector<36x128xf32>
    %cst = arith.constant dense<0.000000e+00> : vector<128x128xf32>
    %42 = tpu.matmul %40, %41, %cst {dimension_numbers = #tpu.dot_dimension_numbers<[1], [0], [0], [1], [0, 0, 1, 1], [], []>} : vector<128x36xf32>, vector<36x128xf32>, vector<128x128xf32> -> vector<128x128xf32>
    %c0_22 = arith.constant 0 : index
    %c0_23 = arith.constant 0 : index
    %c0_24 = arith.constant 0 : index
    %43 = vector.load %arg4[%c0_22, %c0_23, %c0_24] : memref<1x128x128xf32, #tpu.memory_space<vmem>>, vector<1x128x128xf32>
    %44 = vector.shape_cast %43 : vector<1x128x128xf32> to vector<128x128xf32>
    %45 = vector.shape_cast %42 : vector<128x128xf32> to vector<1x128x128xf32>
    tpu.vector_store %arg4[%c0_22, %c0_23, %c0_24], %45 {strides = array<i32>} : memref<1x128x128xf32, #tpu.memory_space<vmem>>, vector<1x128x128xf32>,
    return
  }
  func.func @transform_0(%arg0: i32, %arg1: i32) -> (i32, i32, i32, i32) {
    %c0_i32 = arith.constant 0 : i32
    %c0_i32_0 = arith.constant 0 : i32
    %c0_i32_1 = arith.constant 0 : i32
    %c0_i32_2 = arith.constant 0 : i32
    return %arg0, %c0_i32, %c0_i32_0, %c0_i32_1 : i32, i32, i32, i32
  }
  func.func @transform_1(%arg0: i32, %arg1: i32) -> (i32, i32) {
    %c0_i32 = arith.constant 0 : i32
    %c0_i32_0 = arith.constant 0 : i32
    %c0_i32_1 = arith.constant 0 : i32
    return %c0_i32, %c0_i32_0 : i32, i32
  }
  func.func @transform_2(%arg0: i32, %arg1: i32) -> (i32, i32, i32) {
    %c0_i32 = arith.constant 0 : i32
    %c0_i32_0 = arith.constant 0 : i32
    return %arg0, %arg1, %c0_i32 : i32, i32, i32
  }
}

</mosaic_0001>

<llo_original>
// kernel: upsample_x4.1
$region0: #{upsample_x4.1}
  #allocation0 [shape = 'u32[]', space=smem, size = 0x4, offset = 0x4, fixed_abs, tag = 'smem constant byte address 0x4 - core index']
  #allocation1 [shape = 'u32[144,128]{1,0:T(1,128)}', space=vmem, size = 0x12000, scoped, tag = 'internal scratch']
  #allocation2 [shape = 'f32[128,36]{1,0:T(8,128)}', space=vmem, size = 0x10000, scoped, tag = 'scratch operand']
  %s0 = inlined_call_operand.vmem [shape: f32[2,18,18,4], index: 0, kind: input, shape index: {}]
  %s1 = inlined_call_operand.vmem [shape: f32[36,128], index: 1, kind: input, shape index: {}]
  %s2 = inlined_call_operand.vmem [shape: f32[2,256,128], index: 2, kind: output, shape index: {}]
  %s3 = sld [smem:[#allocation0]]
  $region41: #{upsample_x4.1} parent=0
    _
  %s5 = ssub.s32 1, %s3
  %s6 = scalar_select 0, %s5, %s3
  loop: start=0, step=1, limit=6
  $region2: #{upsample_x4.1} parent=0 // loop_pre_header
    _
  $region3: #{upsample_x4.1} parent=0 // loop_header
    %s8 = sphi 0, %s12
    %p9 = scmp.ge.s32.totalorder %s8, 6
    %s15 = sphi 0, %s27
    %s16 = sphi 0, %s23
    %s17 = sphi 0, %s15
    %s18 = sphi 0, %s16
    %s19 = sphi 0, %s17
    %s20 = sphi 0, %s18
    %s30 = sphi 0, %s32
    %s33 = sphi 0, %s30
    %s34 = sphi 0, %s33
    %s50 = sphi 0, %s34
    %s54 = sphi 0, %s54
    %s56 = sphi 0, %s54
    %s57 = sphi 0, %s56
    %s71 = sphi 0, %s57
    %s79 = sphi 0, %s81
    %s82 = sphi 0, %s79
    %s83 = sphi 0, %s82
    %s99 = sphi 0, %s83
  $region4: #{upsample_x4.1} parent=0 // loop_header_branch
    %11 = sbr.rel (%p9) target = $region8
  $region5: #{upsample_x4.1} parent=0 // loop_body
    %s13 = ssub.s32 %s8, 1
    %s14 = ssub.s32 %s8, 2
    %s21 = sadd.s32 1, %s16
    %p22 = scmp.ge.s32.totalorder %s21, 2
    %s23 = scalar_select %p22, 0, %s21
    %s24 = sadd.s32 1, %s15
    %s25 = scalar_select %p22, %s24, %s15
    %p26 = scmp.ge.s32.totalorder %s25, 2
    %s27 = scalar_select %p26, 0, %s25
    %s28 = ssub.s32 %s15, %s27
    %p29 = scmp.eq.s32.totalorder %s28, 0
    %s31 = sadd.s32 %s30, 1
    %s32 = scalar_select %p29, %s30, %s31
    %p35 = pneg %p29
    %p36 = scmp.eq.s32.totalorder %s8, 3
    %p37 = por %p35, %p36
    %p38 = scmp.ne.s32.totalorder %s30, %s33
    %p39 = scmp.eq.s32.totalorder %s8, 0
    %p40 = por %p38, %p39
    %p41 = scmp.ne.s32.totalorder %s30, %s33
    %p42 = scmp.eq.s32.totalorder %s13, 3
    %p43 = por %p41, %p42
    %p44 = scmp.ne.s32.totalorder %s33, %s34
    %p45 = scmp.eq.s32.totalorder %s13, 0
    %p46 = por %p44, %p45
    %p47 = scmp.ne.s32.totalorder %s33, %s34
    %p48 = scmp.eq.s32.totalorder %s14, 3
    %p49 = por %p47, %p48
    %p51 = scmp.ne.s32.totalorder %s34, %s50
    %p52 = scmp.eq.s32.totalorder %s14, 0
    %p53 = por %p51, %p52
    %s55 = sadd.s32 %s54, 1
    %p58 = scmp.eq.s32.totalorder %s8, 3
    %p59 = scmp.ne.s32.totalorder %s54, %s56
    %p60 = scmp.eq.s32.totalorder %s8, 0
    %p61 = por %p59, %p60
    %p62 = scmp.ne.s32.totalorder %s54, %s56
    %p63 = scmp.eq.s32.totalorder %s13, 3
    %p64 = por %p62, %p63
    %p65 = scmp.ne.s32.totalorder %s56, %s57
    %p66 = scmp.eq.s32.totalorder %s13, 0
    %p67 = por %p65, %p66
    %p68 = scmp.ne.s32.totalorder %s56, %s57
    %p69 = scmp.eq.s32.totalorder %s14, 3
    %p70 = por %p68, %p69
    %p72 = scmp.ne.s32.totalorder %s57, %s71
    %p73 = scmp.eq.s32.totalorder %s14, 0
    %p74 = por %p72, %p73
    %s75 = ssub.s32 %s15, %s27
    %s76 = ssub.s32 %s16, %s23
    %s77 = sor.u32 %s75, %s76
    %p78 = scmp.eq.s32.totalorder %s77, 0
    %s80 = sadd.s32 %s79, 1
    %s81 = scalar_select %p78, %s79, %s80
    %p84 = pneg %p78
    %p85 = scmp.eq.s32.totalorder %s8, 3
    %p86 = por %p84, %p85
    %p87 = scmp.ne.s32.totalorder %s79, %s82
    %p88 = scmp.eq.s32.totalorder %s8, 0
    %p89 = por %p87, %p88
    %p90 = scmp.ne.s32.totalorder %s79, %s82
    %p91 = scmp.eq.s32.totalorder %s13, 3
    %p92 = por %p90, %p91
    %p93 = scmp.ne.s32.totalorder %s82, %s83
    %p94 = scmp.eq.s32.totalorder %s13, 0
    %p95 = por %p93, %p94
    %p96 = scmp.ne.s32.totalorder %s82, %s83
    %p97 = scmp.eq.s32.totalorder %s14, 3
    %p98 = por %p96, %p97
    %p100 = scmp.ne.s32.totalorder %s83, %s99
    %p101 = scmp.eq.s32.totalorder %s14, 0
    %p102 = por %p100, %p101
    %p103 = scmp.le.s32.totalorder 1, %s8
    %p104 = scmp.lt.s32.totalorder %s8, 5
    %p105 = pnand %p103, %p104
    %p106 = pneg %p105
    // Predicated region
    $region9: #{upsample_x4.1} parent=5 // pred_check
      _
    $region10: #{upsample_x4.1} parent=5 // pred_check_branch
      %108 = sbr.rel (%p105) target = $region12
    $region11: #{upsample_x4.1} parent=5 // pred_region
      %s109 = ssub.s32 %s8, 1
      // Predicated region
      $region13: #{upsample_x4.1} parent=11 // pred_check
        %p110 = pneg %p67
      $region14: #{upsample_x4.1} parent=11 // pred_check_branch
        %112 = sbr.rel (%p110) target = $region16
      $region15: #{upsample_x4.1} parent=11 // pred_region
        _
      $region16: #{upsample_x4.1} parent=11 // pred_fallthru
        _
    $region12: #{upsample_x4.1} parent=5 // pred_fallthru
      _
    %p113 = scmp.lt.s32.totalorder %s8, 4
    // Predicated region
    $region17: #{upsample_x4.1} parent=5 // pred_check
      %p114 = pneg %p113
    $region18: #{upsample_x4.1} parent=5 // pred_check_branch
      %116 = sbr.rel (%p114) target = $region20
    $region19: #{upsample_x4.1} parent=5 // pred_region
      // Predicated region
      $region21: #{upsample_x4.1} parent=19 // pred_check
        %p117 = pneg %p40
      $region22: #{upsample_x4.1} parent=19 // pred_check_branch
        %119 = sbr.rel (%p117) target = $region24
      $region23: #{upsample_x4.1} parent=19 // pred_region
        %p120 = scmp.lt.s32.totalorder %s15, 1
        %s121 = scalar_select %p120, %s15, 1
        %s122 = smul.addr %s121, 54
        %s123 = smul.addr %s122, 8
        %s124 = scalar_lea.vmem %s0, %s123
      $region24: #{upsample_x4.1} parent=19 // pred_fallthru
        _
    $region20: #{upsample_x4.1} parent=5 // pred_fallthru
      _
    %p125 = scmp.le.s32.totalorder 1, %s8
    %p126 = scmp.lt.s32.totalorder %s8, 5
    %p127 = pnand %p125, %p126
    %p128 = pneg %p127
    // Predicated region
    $region25: #{upsample_x4.1} parent=5 // pred_check
      _
    $region26: #{upsample_x4.1} parent=5 // pred_check_branch
      %130 = sbr.rel (%p127) target = $region28
    $region27: #{upsample_x4.1} parent=5 // pred_region
      %s131 = ssub.s32 %s8, 1
      %p132 = scmp.lt.s32.totalorder %s17, 1
      %s133 = scalar_select %p132, %s17, 1
      %s134 = smul.addr %s133, 54
      %s135 = smul.addr %s134, 8
      %s136 = scalar_lea.vmem %s0, %s135
      %p137 = pneg %p46
      %p138 = pneg %p43
      %p139 = pneg %p67
      %p140 = pneg %p64
      %p141 = pneg %p95
      %p142 = pneg %p92
      %s143 = smul.u32 16, %s18
      %p144 = scmp.lt.s32.totalorder %s17, 1
      %s145 = scalar_select %p144, %s17, 1
      %p146 = scmp.lt.s32.totalorder %s143, 31
      %s147 = scalar_select %p146, %s143, 31
      %s148 = smul.addr %s145, 32
      %s149 = sadd.s32 %s147, %s148
      %s150 = smul.addr %s149, 8
      %s151 = scalar_lea.vmem %s2, %s150
      %p152 = scmp.lt.s32.totalorder %s17, 1
      %s153 = scalar_select %p152, %s17, 1
      %s154 = smul.addr %s153, 54
      %s155 = smul.addr %s154, 8
      %s156 = scalar_lea.vmem %s0, %s155
      %s157 = smul.u32 16, %s18
      %p158 = scmp.lt.s32.totalorder %s17, 1
      %s159 = scalar_select %p158, %s17, 1
      %p160 = scmp.lt.s32.totalorder %s157, 31
      %s161 = scalar_select %p160, %s157, 31
      %s162 = smul.addr %s159, 32
      %s163 = sadd.s32 %s161, %s162
      %s164 = smul.addr %s163, 8
      %s165 = scalar_lea.vmem %s2, %s164
      %s166 = smul.u32 16, %s18
      %s167 = smul.u32 %s18, 8
      %s168 = smul.u32 %s167, 24
      %s169 = scalar_lea.vmem %s156, %s168
      %v170 = vld [vmem:[%s169] sm:$0xff]
      %v171 = vld [vmem:[%s169 + $0x8] sm:$0xff]
      %v172 = vld [vmem:[%s169 + $0x10] sm:$0x3]
      %v173 = vld [vmem:[%s169 + $0x18] sm:$0xff]
      %v174 = vld [vmem:[%s169 + $0x20] sm:$0xff]
      %v175 = vld [vmem:[%s169 + $0x28] sm:$0x3]
      %v176 = vld [vmem:[%s169 + $0x30] sm:$0xff]
      %v177 = vld [vmem:[%s169 + $0x38] sm:$0xff]
      %v178 = vld [vmem:[%s169 + $0x40] sm:$0x3]
      %v179 = vld [vmem:[%s169 + $0x48] sm:$0xff]
      %v180 = vld [vmem:[%s169 + $0x50] sm:$0xff]
      %v181 = vld [vmem:[%s169 + $0x58] sm:$0x3]
      %v182 = vld [vmem:[%s169 + $0x60] sm:$0xff]
      %v183 = vld [vmem:[%s169 + $0x68] sm:$0xff]
      %v184 = vld [vmem:[%s169 + $0x70] sm:$0x3]
      %v185 = vld [vmem:[%s169 + $0x78] sm:$0xff]
      %v186 = vld [vmem:[%s169 + $0x80] sm:$0xff]
      %v187 = vld [vmem:[%s169 + $0x88] sm:$0x3]
      %v188 = vld [vmem:[%s169 + $0x90] sm:$0xff]
      %v189 = vld [vmem:[%s169 + $0x98] sm:$0xff]
      %v190 = vld [vmem:[%s169 + $0xa0] sm:$0x3]
      %v191 = vld [vmem:[%s169 + $0xa8] sm:$0xff]
      %v192 = vld [vmem:[%s169 + $0xb0] sm:$0xff]
      %v193 = vld [vmem:[%s169 + $0xb8] sm:$0x3]
      %vm194 = vcmask 31744
      %195 = vst.msk [vmem:[#allocation2] sm:$0xff] %vm194, %v170
      %196 = vst.msk [vmem:[#allocation2 + $0x8] sm:$0xff] %vm194, %v171
      %197 = vst.msk [vmem:[#allocation2 + $0x10] sm:$0xff] %vm194, %v173
      %198 = vst.msk [vmem:[#allocation2 + $0x18] sm:$0xff] %vm194, %v174
      %199 = vst.msk [vmem:[#allocation2 + $0x20] sm:$0xff] %vm194, %v176
      %200 = vst.msk [vmem:[#allocation2 + $0x28] sm:$0xff] %vm194, %v177
      %201 = vst.msk [vmem:[#allocation2 + $0x30] sm:$0xff] %vm194, %v179
      %202 = vst.msk [vmem:[#allocation2 + $0x38] sm:$0xff] %vm194, %v180
      %203 = vst.msk [vmem:[#allocation2 + $0x40] sm:$0xff] %vm194, %v182
      %204 = vst.msk [vmem:[#allocation2 + $0x48] sm:$0xff] %vm194, %v183
      %205 = vst.msk [vmem:[#allocation2 + $0x50] sm:$0xff] %vm194, %v185
      %206 = vst.msk [vmem:[#allocation2 + $0x58] sm:$0xff] %vm194, %v186
      %207 = vst.msk [vmem:[#allocation2 + $0x60] sm:$0xff] %vm194, %v188
      %208 = vst.msk [vmem:[#allocation2 + $0x68] sm:$0xff] %vm194, %v189
      %209 = vst.msk [vmem:[#allocation2 + $0x70] sm:$0xff] %vm194, %v191
      %210 = vst.msk [vmem:[#allocation2 + $0x78] sm:$0xff] %vm194, %v192
      %vm235 = vcmask 1046528
      %v236 = vrot.slane %v170, 1
      %v237 = vrot.slane %v171, 1
      %v238 = vsel %vm235, %v236, %v237
      %v239 = vrot.slane %v172, 1
      %v240 = vsel %vm235, %v237, %v239
      %v241 = vrot.slane %v173, 1
      %v242 = vrot.slane %v174, 1
      %v243 = vsel %vm235, %v241, %v242
      %v244 = vrot.slane %v175, 1
      %v245 = vsel %vm235, %v242, %v244
      %v246 = vrot.slane %v176, 1
      %v247 = vrot.slane %v177, 1
      %v248 = vsel %vm235, %v246, %v247
      %v249 = vrot.slane %v178, 1
      %v250 = vsel %vm235, %v247, %v249
      %v251 = vrot.slane %v179, 1
      %v252 = vrot.slane %v180, 1
      %v253 = vsel %vm235, %v251, %v252
      %v254 = vrot.slane %v181, 1
      %v255 = vsel %vm235, %v252, %v254
      %v256 = vrot.slane %v182, 1
      %v257 = vrot.slane %v183, 1
      %v258 = vsel %vm235, %v256, %v257
      %v259 = vrot.slane %v184, 1
      %v260 = vsel %vm235, %v257, %v259
      %v261 = vrot.slane %v185, 1
      %v262 = vrot.slane %v186, 1
      %v263 = vsel %vm235, %v261, %v262
      %v264 = vrot.slane %v187, 1
      %v265 = vsel %vm235, %v262, %v264
      %v266 = vrot.slane %v188, 1
      %v267 = vrot.slane %v189, 1
      %v268 = vsel %vm235, %v266, %v267
      %v269 = vrot.slane %v190, 1
      %v270 = vsel %vm235, %v267, %v269
      %v271 = vrot.slane %v191, 1
      %v272 = vrot.slane %v192, 1
      %v273 = vsel %vm235, %v271, %v272
      %v274 = vrot.slane %v193, 1
      %v275 = vsel %vm235, %v272, %v274
      %276 = vrot.lane.b32.xlu0 %v238, 4
      %v277 = vpop.permute.xlu0 %276
      %278 = vrot.lane.b32.xlu0 %v240, 4
      %v279 = vpop.permute.xlu0 %278
      %280 = vrot.lane.b32.xlu0 %v243, 4
      %v281 = vpop.permute.xlu0 %280
      %282 = vrot.lane.b32.xlu0 %v245, 4
      %v283 = vpop.permute.xlu0 %282
      %284 = vrot.lane.b32.xlu0 %v248, 4
      %v285 = vpop.permute.xlu0 %284
      %286 = vrot.lane.b32.xlu0 %v250, 4
      %v287 = vpop.permute.xlu0 %286
      %288 = vrot.lane.b32.xlu0 %v253, 4
      %v289 = vpop.permute.xlu0 %288
      %290 = vrot.lane.b32.xlu0 %v255, 4
      %v291 = vpop.permute.xlu0 %290
      %292 = vrot.lane.b32.xlu0 %v258, 4
      %v293 = vpop.permute.xlu0 %292
      %294 = vrot.lane.b32.xlu0 %v260, 4
      %v295 = vpop.permute.xlu0 %294
      %296 = vrot.lane.b32.xlu0 %v263, 4
      %v297 = vpop.permute.xlu0 %296
      %298 = vrot.lane.b32.xlu0 %v265, 4
      %v299 = vpop.permute.xlu0 %298
      %300 = vrot.lane.b32.xlu0 %v268, 4
      %v301 = vpop.permute.xlu0 %300
      %302 = vrot.lane.b32.xlu0 %v270, 4
      %v303 = vpop.permute.xlu0 %302
      %304 = vrot.lane.b32.xlu0 %v273, 4
      %v305 = vpop.permute.xlu0 %304
      %306 = vrot.lane.b32.xlu0 %v275, 4
      %v307 = vpop.permute.xlu0 %306
      %vm324 = vcmask 64544
      %325 = vst.msk [vmem:[#allocation2] sm:$0xff] %vm324, %v277
      %326 = vst.msk [vmem:[#allocation2 + $0x8] sm:$0xff] %vm324, %v279
      %327 = vst.msk [vmem:[#allocation2 + $0x10] sm:$0xff] %vm324, %v281
      %328 = vst.msk [vmem:[#allocation2 + $0x18] sm:$0xff] %vm324, %v283
      %329 = vst.msk [vmem:[#allocation2 + $0x20] sm:$0xff] %vm324, %v285
      %330 = vst.msk [vmem:[#allocation2 + $0x28] sm:$0xff] %vm324, %v287
      %331 = vst.msk [vmem:[#allocation2 + $0x30] sm:$0xff] %vm324, %v289
      %332 = vst.msk [vmem:[#allocation2 + $0x38] sm:$0xff] %vm324, %v291
      %333 = vst.msk [vmem:[#allocation2 + $0x40] sm:$0xff] %vm324, %v293
      %334 = vst.msk [vmem:[#allocation2 + $0x48] sm:$0xff] %vm324, %v295
      %335 = vst.msk [vmem:[#allocation2 + $0x50] sm:$0xff] %vm324, %v297
      %336 = vst.msk [vmem:[#allocation2 + $0x58] sm:$0xff] %vm324, %v299
      %337 = vst.msk [vmem:[#allocation2 + $0x60] sm:$0xff] %vm324, %v301
      %338 = vst.msk [vmem:[#allocation2 + $0x68] sm:$0xff] %vm324, %v303
      %339 = vst.msk [vmem:[#allocation2 + $0x70] sm:$0xff] %vm324, %v305
      %340 = vst.msk [vmem:[#allocation2 + $0x78] sm:$0xff] %vm324, %v307
      %vm341 = vcmask 1045504
      %v342 = vrot.slane %v170, 2
      %v343 = vrot.slane %v171, 2
      %v344 = vsel %vm341, %v342, %v343
      %v345 = vrot.slane %v172, 2
      %v346 = vsel %vm341, %v343, %v345
      %v347 = vrot.slane %v173, 2
      %v348 = vrot.slane %v174, 2
      %v349 = vsel %vm341, %v347, %v348
      %v350 = vrot.slane %v175, 2
      %v351 = vsel %vm341, %v348, %v350
      %v352 = vrot.slane %v176, 2
      %v353 = vrot.slane %v177, 2
      %v354 = vsel %vm341, %v352, %v353
      %v355 = vrot.slane %v178, 2
      %v356 = vsel %vm341, %v353, %v355
      %v357 = vrot.slane %v179, 2
      %v358 = vrot.slane %v180, 2
      %v359 = vsel %vm341, %v357, %v358
      %v360 = vrot.slane %v181, 2
      %v361 = vsel %vm341, %v358, %v360
      %v362 = vrot.slane %v182, 2
      %v363 = vrot.slane %v183, 2
      %v364 = vsel %vm341, %v362, %v363
      %v365 = vrot.slane %v184, 2
      %v366 = vsel %vm341, %v363, %v365
      %v367 = vrot.slane %v185, 2
      %v368 = vrot.slane %v186, 2
      %v369 = vsel %vm341, %v367, %v368
      %v370 = vrot.slane %v187, 2
      %v371 = vsel %vm341, %v368, %v370
      %v372 = vrot.slane %v188, 2
      %v373 = vrot.slane %v189, 2
      %v374 = vsel %vm341, %v372, %v373
      %v375 = vrot.slane %v190, 2
      %v376 = vsel %vm341, %v373, %v375
      %v377 = vrot.slane %v191, 2
      %v378 = vrot.slane %v192, 2
      %v379 = vsel %vm341, %v377, %v378
      %v380 = vrot.slane %v193, 2
      %v381 = vsel %vm341, %v378, %v380
      %382 = vrot.lane.b32.xlu0 %v344, 8
      %v383 = vpop.permute.xlu0 %382
      %384 = vrot.lane.b32.xlu0 %v346, 8
      %v385 = vpop.permute.xlu0 %384
      %386 = vrot.lane.b32.xlu0 %v349, 8
      %v387 = vpop.permute.xlu0 %386
      %388 = vrot.lane.b32.xlu0 %v351, 8
      %v389 = vpop.permute.xlu0 %388
      %390 = vrot.lane.b32.xlu0 %v354, 8
      %v391 = vpop.permute.xlu0 %390
      %392 = vrot.lane.b32.xlu0 %v356, 8
      %v393 = vpop.permute.xlu0 %392
      %394 = vrot.lane.b32.xlu0 %v359, 8
      %v395 = vpop.permute.xlu0 %394
      %396 = vrot.lane.b32.xlu0 %v361, 8
      %v397 = vpop.permute.xlu0 %396
      %398 = vrot.lane.b32.xlu0 %v364, 8
      %v399 = vpop.permute.xlu0 %398
      %400 = vrot.lane.b32.xlu0 %v366, 8
      %v401 = vpop.permute.xlu0 %400
      %402 = vrot.lane.b32.xlu0 %v369, 8
      %v403 = vpop.permute.xlu0 %402
      %404 = vrot.lane.b32.xlu0 %v371, 8
      %v405 = vpop.permute.xlu0 %404
      %406 = vrot.lane.b32.xlu0 %v374, 8
      %v407 = vpop.permute.xlu0 %406
      %408 = vrot.lane.b32.xlu0 %v376, 8
      %v409 = vpop.permute.xlu0 %408
      %410 = vrot.lane.b32.xlu0 %v379, 8
      %v411 = vpop.permute.xlu0 %410
      %412 = vrot.lane.b32.xlu0 %v381, 8
      %v413 = vpop.permute.xlu0 %412
      %vm430 = vcmask 97344
      %431 = vst.msk [vmem:[#allocation2] sm:$0xff] %vm430, %v383
      %432 = vst.msk [vmem:[#allocation2 + $0x8] sm:$0xff] %vm430, %v385
      %433 = vst.msk [vmem:[#allocation2 + $0x10] sm:$0xff] %vm430, %v387
      %434 = vst.msk [vmem:[#allocation2 + $0x18] sm:$0xff] %vm430, %v389
      %435 = vst.msk [vmem:[#allocation2 + $0x20] sm:$0xff] %vm430, %v391
      %436 = vst.msk [vmem:[#allocation2 + $0x28] sm:$0xff] %vm430, %v393
      %437 = vst.msk [vmem:[#allocation2 + $0x30] sm:$0xff] %vm430, %v395
      %438 = vst.msk [vmem:[#allocation2 + $0x38] sm:$0xff] %vm430, %v397
      %439 = vst.msk [vmem:[#allocation2 + $0x40] sm:$0xff] %vm430, %v399
      %440 = vst.msk [vmem:[#allocation2 + $0x48] sm:$0xff] %vm430, %v401
      %441 = vst.msk [vmem:[#allocation2 + $0x50] sm:$0xff] %vm430, %v403
      %442 = vst.msk [vmem:[#allocation2 + $0x58] sm:$0xff] %vm430, %v405
      %443 = vst.msk [vmem:[#allocation2 + $0x60] sm:$0xff] %vm430, %v407
      %444 = vst.msk [vmem:[#allocation2 + $0x68] sm:$0xff] %vm430, %v409
      %445 = vst.msk [vmem:[#allocation2 + $0x70] sm:$0xff] %vm430, %v411
      %446 = vst.msk [vmem:[#allocation2 + $0x78] sm:$0xff] %vm430, %v413
      %s447 = sadd.s32 %s167, 1
      %s448 = smul.u32 %s447, 24
      %s449 = scalar_lea.vmem %s156, %s448
      %v450 = vld [vmem:[%s449] sm:$0xff]
      %v451 = vld [vmem:[%s449 + $0x8] sm:$0xff]
      %v452 = vld [vmem:[%s449 + $0x10] sm:$0x3]
      %v453 = vld [vmem:[%s449 + $0x18] sm:$0xff]
      %v454 = vld [vmem:[%s449 + $0x20] sm:$0xff]
      %v455 = vld [vmem:[%s449 + $0x28] sm:$0x3]
      %v456 = vld [vmem:[%s449 + $0x30] sm:$0xff]
      %v457 = vld [vmem:[%s449 + $0x38] sm:$0xff]
      %v458 = vld [vmem:[%s449 + $0x40] sm:$0x3]
      %v459 = vld [vmem:[%s449 + $0x48] sm:$0xff]
      %v460 = vld [vmem:[%s449 + $0x50] sm:$0xff]
      %v461 = vld [vmem:[%s449 + $0x58] sm:$0x3]
      %v462 = vld [vmem:[%s449 + $0x60] sm:$0xff]
      %v463 = vld [vmem:[%s449 + $0x68] sm:$0xff]
      %v464 = vld [vmem:[%s449 + $0x70] sm:$0x3]
      %v465 = vld [vmem:[%s449 + $0x78] sm:$0xff]
      %v466 = vld [vmem:[%s449 + $0x80] sm:$0xff]
      %v467 = vld [vmem:[%s449 + $0x88] sm:$0x3]
      %v468 = vld [vmem:[%s449 + $0x90] sm:$0xff]
      %v469 = vld [vmem:[%s449 + $0x98] sm:$0xff]
      %v470 = vld [vmem:[%s449 + $0xa0] sm:$0x3]
      %v471 = vld [vmem:[%s449 + $0xa8] sm:$0xff]
      %v472 = vld [vmem:[%s449 + $0xb0] sm:$0xff]
      %v473 = vld [vmem:[%s449 + $0xb8] sm:$0x3]
      %490 = vrot.lane.b32.xlu0 %v450, 12
      %v491 = vpop.permute.xlu0 %490
      %492 = vrot.lane.b32.xlu0 %v451, 12
      %v493 = vpop.permute.xlu0 %492
      %494 = vrot.lane.b32.xlu0 %v453, 12
      %v495 = vpop.permute.xlu0 %494
      %496 = vrot.lane.b32.xlu0 %v454, 12
      %v497 = vpop.permute.xlu0 %496
      %498 = vrot.lane.b32.xlu0 %v456, 12
      %v499 = vpop.permute.xlu0 %498
      %500 = vrot.lane.b32.xlu0 %v457, 12
      %v501 = vpop.permute.xlu0 %500
      %502 = vrot.lane.b32.xlu0 %v459, 12
      %v503 = vpop.permute.xlu0 %502
      %504 = vrot.lane.b32.xlu0 %v460, 12
      %v505 = vpop.permute.xlu0 %504
      %506 = vrot.lane.b32.xlu0 %v462, 12
      %v507 = vpop.permute.xlu0 %506
      %508 = vrot.lane.b32.xlu0 %v463, 12
      %v509 = vpop.permute.xlu0 %508
      %510 = vrot.lane.b32.xlu0 %v465, 12
      %v511 = vpop.permute.xlu0 %510
      %512 = vrot.lane.b32.xlu0 %v466, 12
      %v513 = vpop.permute.xlu0 %512
      %514 = vrot.lane.b32.xlu0 %v468, 12
      %v515 = vpop.permute.xlu0 %514
      %516 = vrot.lane.b32.xlu0 %v469, 12
      %v517 = vpop.permute.xlu0 %516
      %518 = vrot.lane.b32.xlu0 %v471, 12
      %v519 = vpop.permute.xlu0 %518
      %520 = vrot.lane.b32.xlu0 %v472, 12
      %v521 = vpop.permute.xlu0 %520
      %vm538 = vcmask 130144
      %539 = vst.msk [vmem:[#allocation2] sm:$0xff] %vm538, %v491
      %540 = vst.msk [vmem:[#allocation2 + $0x8] sm:$0xff] %vm538, %v493
      %541 = vst.msk [vmem:[#allocation2 + $0x10] sm:$0xff] %vm538, %v495
      %542 = vst.msk [vmem:[#allocation2 + $0x18] sm:$0xff] %vm538, %v497
      %543 = vst.msk [vmem:[#allocation2 + $0x20] sm:$0xff] %vm538, %v499
      %544 = vst.msk [vmem:[#allocation2 + $0x28] sm:$0xff] %vm538, %v501
      %545 = vst.msk [vmem:[#allocation2 + $0x30] sm:$0xff] %vm538, %v503
      %546 = vst.msk [vmem:[#allocation2 + $0x38] sm:$0xff] %vm538, %v505
      %547 = vst.msk [vmem:[#allocation2 + $0x40] sm:$0xff] %vm538, %v507
      %548 = vst.msk [vmem:[#allocation2 + $0x48] sm:$0xff] %vm538, %v509
      %549 = vst.msk [vmem:[#allocation2 + $0x50] sm:$0xff] %vm538, %v511
      %550 = vst.msk [vmem:[#allocation2 + $0x58] sm:$0xff] %vm538, %v513
      %551 = vst.msk [vmem:[#allocation2 + $0x60] sm:$0xff] %vm538, %v515
      %552 = vst.msk [vmem:[#allocation2 + $0x68] sm:$0xff] %vm538, %v517
      %553 = vst.msk [vmem:[#allocation2 + $0x70] sm:$0xff] %vm538, %v519
      %554 = vst.msk [vmem:[#allocation2 + $0x78] sm:$0xff] %vm538, %v521
      %v563 = vrot.slane %v450, 1
      %v564 = vrot.slane %v451, 1
      %v565 = vsel %vm235, %v563, %v564
      %v566 = vrot.slane %v452, 1
      %v567 = vsel %vm235, %v564, %v566
      %v568 = vrot.slane %v453, 1
      %v569 = vrot.slane %v454, 1
      %v570 = vsel %vm235, %v568, %v569
      %v571 = vrot.slane %v455, 1
      %v572 = vsel %vm235, %v569, %v571
      %v573 = vrot.slane %v456, 1
      %v574 = vrot.slane %v457, 1
      %v575 = vsel %vm235, %v573, %v574
      %v576 = vrot.slane %v458, 1
      %v577 = vsel %vm235, %v574, %v576
      %v578 = vrot.slane %v459, 1
      %v579 = vrot.slane %v460, 1
      %v580 = vsel %vm235, %v578, %v579
      %v581 = vrot.slane %v461, 1
      %v582 = vsel %vm235, %v579, %v581
      %v583 = vrot.slane %v462, 1
      %v584 = vrot.slane %v463, 1
      %v585 = vsel %vm235, %v583, %v584
      %v586 = vrot.slane %v464, 1
      %v587 = vsel %vm235, %v584, %v586
      %v588 = vrot.slane %v465, 1
      %v589 = vrot.slane %v466, 1
      %v590 = vsel %vm235, %v588, %v589
      %v591 = vrot.slane %v467, 1
      %v592 = vsel %vm235, %v589, %v591
      %v593 = vrot.slane %v468, 1
      %v594 = vrot.slane %v469, 1
      %v595 = vsel %vm235, %v593, %v594
      %v596 = vrot.slane %v470, 1
      %v597 = vsel %vm235, %v594, %v596
      %v598 = vrot.slane %v471, 1
      %v599 = vrot.slane %v472, 1
      %v600 = vsel %vm235, %v598, %v599
      %v601 = vrot.slane %v473, 1
      %v602 = vsel %vm235, %v599, %v601
      %603 = vrot.lane.b32.xlu0 %v565, 16
      %v604 = vpop.permute.xlu0 %603
      %605 = vrot.lane.b32.xlu0 %v567, 16
      %v606 = vpop.permute.xlu0 %605
      %607 = vrot.lane.b32.xlu0 %v570, 16
      %v608 = vpop.permute.xlu0 %607
      %609 = vrot.lane.b32.xlu0 %v572, 16
      %v610 = vpop.permute.xlu0 %609
      %611 = vrot.lane.b32.xlu0 %v575, 16
      %v612 = vpop.permute.xlu0 %611
      %613 = vrot.lane.b32.xlu0 %v577, 16
      %v614 = vpop.permute.xlu0 %613
      %615 = vrot.lane.b32.xlu0 %v580, 16
      %v616 = vpop.permute.xlu0 %615
      %617 = vrot.lane.b32.xlu0 %v582, 16
      %v618 = vpop.permute.xlu0 %617
      %619 = vrot.lane.b32.xlu0 %v585, 16
      %v620 = vpop.permute.xlu0 %619
      %621 = vrot.lane.b32.xlu0 %v587, 16
      %v622 = vpop.permute.xlu0 %621
      %623 = vrot.lane.b32.xlu0 %v590, 16
      %v624 = vpop.permute.xlu0 %623
      %625 = vrot.lane.b32.xlu0 %v592, 16
      %v626 = vpop.permute.xlu0 %625
      %627 = vrot.lane.b32.xlu0 %v595, 16
      %v628 = vpop.permute.xlu0 %627
      %629 = vrot.lane.b32.xlu0 %v597, 16
      %v630 = vpop.permute.xlu0 %629
      %631 = vrot.lane.b32.xlu0 %v600, 16
      %v632 = vpop.permute.xlu0 %631
      %633 = vrot.lane.b32.xlu0 %v602, 16
      %v634 = vpop.permute.xlu0 %633
      %vm651 = vcmask 162944
      %652 = vst.msk [vmem:[#allocation2] sm:$0xff] %vm651, %v604
      %653 = vst.msk [vmem:[#allocation2 + $0x8] sm:$0xff] %vm651, %v606
      %654 = vst.msk [vmem:[#allocation2 + $0x10] sm:$0xff] %vm651, %v608
      %655 = vst.msk [vmem:[#allocation2 + $0x18] sm:$0xff] %vm651, %v610
      %656 = vst.msk [vmem:[#allocation2 + $0x20] sm:$0xff] %vm651, %v612
      %657 = vst.msk [vmem:[#allocation2 + $0x28] sm:$0xff] %vm651, %v614
      %658 = vst.msk [vmem:[#allocation2 + $0x30] sm:$0xff] %vm651, %v616
      %659 = vst.msk [vmem:[#allocation2 + $0x38] sm:$0xff] %vm651, %v618
      %660 = vst.msk [vmem:[#allocation2 + $0x40] sm:$0xff] %vm651, %v620
      %661 = vst.msk [vmem:[#allocation2 + $0x48] sm:$0xff] %vm651, %v622
      %662 = vst.msk [vmem:[#allocation2 + $0x50] sm:$0xff] %vm651, %v624
      %663 = vst.msk [vmem:[#allocation2 + $0x58] sm:$0xff] %vm651, %v626
      %664 = vst.msk [vmem:[#allocation2 + $0x60] sm:$0xff] %vm651, %v628
      %665 = vst.msk [vmem:[#allocation2 + $0x68] sm:$0xff] %vm651, %v630
      %666 = vst.msk [vmem:[#allocation2 + $0x70] sm:$0xff] %vm651, %v632
      %667 = vst.msk [vmem:[#allocation2 + $0x78] sm:$0xff] %vm651, %v634
      %v668 = vrot.slane %v450, 2
      %v669 = vrot.slane %v451, 2
      %v670 = vsel %vm341, %v668, %v669
      %v671 = vrot.slane %v452, 2
      %v672 = vsel %vm341, %v669, %v671
      %v673 = vrot.slane %v453, 2
      %v674 = vrot.slane %v454, 2
      %v675 = vsel %vm341, %v673, %v674
      %v676 = vrot.slane %v455, 2
      %v677 = vsel %vm341, %v674, %v676
      %v678 = vrot.slane %v456, 2
      %v679 = vrot.slane %v457, 2
      %v680 = vsel %vm341, %v678, %v679
      %v681 = vrot.slane %v458, 2
      %v682 = vsel %vm341, %v679, %v681
      %v683 = vrot.slane %v459, 2
      %v684 = vrot.slane %v460, 2
      %v685 = vsel %vm341, %v683, %v684
      %v686 = vrot.slane %v461, 2
      %v687 = vsel %vm341, %v684, %v686
      %v688 = vrot.slane %v462, 2
      %v689 = vrot.slane %v463, 2
      %v690 = vsel %vm341, %v688, %v689
      %v691 = vrot.slane %v464, 2
      %v692 = vsel %vm341, %v689, %v691
      %v693 = vrot.slane %v465, 2
      %v694 = vrot.slane %v466, 2
      %v695 = vsel %vm341, %v693, %v694
      %v696 = vrot.slane %v467, 2
      %v697 = vsel %vm341, %v694, %v696
      %v698 = vrot.slane %v468, 2
      %v699 = vrot.slane %v469, 2
      %v700 = vsel %vm341, %v698, %v699
      %v701 = vrot.slane %v470, 2
      %v702 = vsel %vm341, %v699, %v701
      %v703 = vrot.slane %v471, 2
      %v704 = vrot.slane %v472, 2
      %v705 = vsel %vm341, %v703, %v704
      %v706 = vrot.slane %v473, 2
      %v707 = vsel %vm341, %v704, %v706
      %708 = vrot.lane.b32.xlu0 %v670, 20
      %v709 = vpop.permute.xlu0 %708
      %710 = vrot.lane.b32.xlu0 %v672, 20
      %v711 = vpop.permute.xlu0 %710
      %712 = vrot.lane.b32.xlu0 %v675, 20
      %v713 = vpop.permute.xlu0 %712
      %714 = vrot.lane.b32.xlu0 %v677, 20
      %v715 = vpop.permute.xlu0 %714
      %716 = vrot.lane.b32.xlu0 %v680, 20
      %v717 = vpop.permute.xlu0 %716
      %718 = vrot.lane.b32.xlu0 %v682, 20
      %v719 = vpop.permute.xlu0 %718
      %720 = vrot.lane.b32.xlu0 %v685, 20
      %v721 = vpop.permute.xlu0 %720
      %722 = vrot.lane.b32.xlu0 %v687, 20
      %v723 = vpop.permute.xlu0 %722
      %724 = vrot.lane.b32.xlu0 %v690, 20
      %v725 = vpop.permute.xlu0 %724
      %726 = vrot.lane.b32.xlu0 %v692, 20
      %v727 = vpop.permute.xlu0 %726
      %728 = vrot.lane.b32.xlu0 %v695, 20
      %v729 = vpop.permute.xlu0 %728
      %730 = vrot.lane.b32.xlu0 %v697, 20
      %v731 = vpop.permute.xlu0 %730
      %732 = vrot.lane.b32.xlu0 %v700, 20
      %v733 = vpop.permute.xlu0 %732
      %734 = vrot.lane.b32.xlu0 %v702, 20
      %v735 = vpop.permute.xlu0 %734
      %736 = vrot.lane.b32.xlu0 %v705, 20
      %v737 = vpop.permute.xlu0 %736
      %738 = vrot.lane.b32.xlu0 %v707, 20
      %v739 = vpop.permute.xlu0 %738
      %vm756 = vcmask 195744
      %757 = vst.msk [vmem:[#allocation2] sm:$0xff] %vm756, %v709
      %758 = vst.msk [vmem:[#allocation2 + $0x8] sm:$0xff] %vm756, %v711
      %759 = vst.msk [vmem:[#allocation2 + $0x10] sm:$0xff] %vm756, %v713
      %760 = vst.msk [vmem:[#allocation2 + $0x18] sm:$0xff] %vm756, %v715
      %761 = vst.msk [vmem:[#allocation2 + $0x20] sm:$0xff] %vm756, %v717
      %762 = vst.msk [vmem:[#allocation2 + $0x28] sm:$0xff] %vm756, %v719
      %763 = vst.msk [vmem:[#allocation2 + $0x30] sm:$0xff] %vm756, %v721
      %764 = vst.msk [vmem:[#allocation2 + $0x38] sm:$0xff] %vm756, %v723
      %765 = vst.msk [vmem:[#allocation2 + $0x40] sm:$0xff] %vm756, %v725
      %766 = vst.msk [vmem:[#allocation2 + $0x48] sm:$0xff] %vm756, %v727
      %767 = vst.msk [vmem:[#allocation2 + $0x50] sm:$0xff] %vm756, %v729
      %768 = vst.msk [vmem:[#allocation2 + $0x58] sm:$0xff] %vm756, %v731
      %769 = vst.msk [vmem:[#allocation2 + $0x60] sm:$0xff] %vm756, %v733
      %770 = vst.msk [vmem:[#allocation2 + $0x68] sm:$0xff] %vm756, %v735
      %771 = vst.msk [vmem:[#allocation2 + $0x70] sm:$0xff] %vm756, %v737
      %772 = vst.msk [vmem:[#allocation2 + $0x78] sm:$0xff] %vm756, %v739
      %s773 = sadd.s32 %s167, 2
      %s774 = smul.u32 %s773, 24
      %s775 = scalar_lea.vmem %s156, %s774
      %v776 = vld [vmem:[%s775] sm:$0xff]
      %v777 = vld [vmem:[%s775 + $0x8] sm:$0xff]
      %v778 = vld [vmem:[%s775 + $0x10] sm:$0x3]
      %v779 = vld [vmem:[%s775 + $0x18] sm:$0xff]
      %v780 = vld [vmem:[%s775 + $0x20] sm:$0xff]
      %v781 = vld [vmem:[%s775 + $0x28] sm:$0x3]
      %v782 = vld [vmem:[%s775 + $0x30] sm:$0xff]
      %v783 = vld [vmem:[%s775 + $0x38] sm:$0xff]
      %v784 = vld [vmem:[%s775 + $0x40] sm:$0x3]
      %v785 = vld [vmem:[%s775 + $0x48] sm:$0xff]
      %v786 = vld [vmem:[%s775 + $0x50] sm:$0xff]
      %v787 = vld [vmem:[%s775 + $0x58] sm:$0x3]
      %v788 = vld [vmem:[%s775 + $0x60] sm:$0xff]
      %v789 = vld [vmem:[%s775 + $0x68] sm:$0xff]
      %v790 = vld [vmem:[%s775 + $0x70] sm:$0x3]
      %v791 = vld [vmem:[%s775 + $0x78] sm:$0xff]
      %v792 = vld [vmem:[%s775 + $0x80] sm:$0xff]
      %v793 = vld [vmem:[%s775 + $0x88] sm:$0x3]
      %v794 = vld [vmem:[%s775 + $0x90] sm:$0xff]
      %v795 = vld [vmem:[%s775 + $0x98] sm:$0xff]
      %v796 = vld [vmem:[%s775 + $0xa0] sm:$0x3]
      %v797 = vld [vmem:[%s775 + $0xa8] sm:$0xff]
      %v798 = vld [vmem:[%s775 + $0xb0] sm:$0xff]
      %v799 = vld [vmem:[%s775 + $0xb8] sm:$0x3]
      %816 = vrot.lane.b32.xlu0 %v776, 24
      %v817 = vpop.permute.xlu0 %816
      %818 = vrot.lane.b32.xlu0 %v777, 24
      %v819 = vpop.permute.xlu0 %818
      %820 = vrot.lane.b32.xlu0 %v779, 24
      %v821 = vpop.permute.xlu0 %820
      %822 = vrot.lane.b32.xlu0 %v780, 24
      %v823 = vpop.permute.xlu0 %822
      %824 = vrot.lane.b32.xlu0 %v782, 24
      %v825 = vpop.permute.xlu0 %824
      %826 = vrot.lane.b32.xlu0 %v783, 24
      %v827 = vpop.permute.xlu0 %826
      %828 = vrot.lane.b32.xlu0 %v785, 24
      %v829 = vpop.permute.xlu0 %828
      %830 = vrot.lane.b32.xlu0 %v786, 24
      %v831 = vpop.permute.xlu0 %830
      %832 = vrot.lane.b32.xlu0 %v788, 24
      %v833 = vpop.permute.xlu0 %832
      %834 = vrot.lane.b32.xlu0 %v789, 24
      %v835 = vpop.permute.xlu0 %834
      %836 = vrot.lane.b32.xlu0 %v791, 24
      %v837 = vpop.permute.xlu0 %836
      %838 = vrot.lane.b32.xlu0 %v792, 24
      %v839 = vpop.permute.xlu0 %838
      %840 = vrot.lane.b32.xlu0 %v794, 24
      %v841 = vpop.permute.xlu0 %840
      %842 = vrot.lane.b32.xlu0 %v795, 24
      %v843 = vpop.permute.xlu0 %842
      %844 = vrot.lane.b32.xlu0 %v797, 24
      %v845 = vpop.permute.xlu0 %844
      %846 = vrot.lane.b32.xlu0 %v798, 24
      %v847 = vpop.permute.xlu0 %846
      %vm864 = vcmask 228544
      %865 = vst.msk [vmem:[#allocation2] sm:$0xff] %vm864, %v817
      %866 = vst.msk [vmem:[#allocation2 + $0x8] sm:$0xff] %vm864, %v819
      %867 = vst.msk [vmem:[#allocation2 + $0x10] sm:$0xff] %vm864, %v821
      %868 = vst.msk [vmem:[#allocation2 + $0x18] sm:$0xff] %vm864, %v823
      %869 = vst.msk [vmem:[#allocation2 + $0x20] sm:$0xff] %vm864, %v825
      %870 = vst.msk [vmem:[#allocation2 + $0x28] sm:$0xff] %vm864, %v827
      %871 = vst.msk [vmem:[#allocation2 + $0x30] sm:$0xff] %vm864, %v829
      %872 = vst.msk [vmem:[#allocation2 + $0x38] sm:$0xff] %vm864, %v831
      %873 = vst.msk [vmem:[#allocation2 + $0x40] sm:$0xff] %vm864, %v833
      %874 = vst.msk [vmem:[#allocation2 + $0x48] sm:$0xff] %vm864, %v835
      %875 = vst.msk [vmem:[#allocation2 + $0x50] sm:$0xff] %vm864, %v837
      %876 = vst.msk [vmem:[#allocation2 + $0x58] sm:$0xff] %vm864, %v839
      %877 = vst.msk [vmem:[#allocation2 + $0x60] sm:$0xff] %vm864, %v841
      %878 = vst.msk [vmem:[#allocation2 + $0x68] sm:$0xff] %vm864, %v843
      %879 = vst.msk [vmem:[#allocation2 + $0x70] sm:$0xff] %vm864, %v845
      %880 = vst.msk [vmem:[#allocation2 + $0x78] sm:$0xff] %vm864, %v847
      %v889 = vrot.slane %v776, 1
      %v890 = vrot.slane %v777, 1
      %v891 = vsel %vm235, %v889, %v890
      %v892 = vrot.slane %v778, 1
      %v893 = vsel %vm235, %v890, %v892
      %v894 = vrot.slane %v779, 1
      %v895 = vrot.slane %v780, 1
      %v896 = vsel %vm235, %v894, %v895
      %v897 = vrot.slane %v781, 1
      %v898 = vsel %vm235, %v895, %v897
      %v899 = vrot.slane %v782, 1
      %v900 = vrot.slane %v783, 1
      %v901 = vsel %vm235, %v899, %v900
      %v902 = vrot.slane %v784, 1
      %v903 = vsel %vm235, %v900, %v902
      %v904 = vrot.slane %v785, 1
      %v905 = vrot.slane %v786, 1
      %v906 = vsel %vm235, %v904, %v905
      %v907 = vrot.slane %v787, 1
      %v908 = vsel %vm235, %v905, %v907
      %v909 = vrot.slane %v788, 1
      %v910 = vrot.slane %v789, 1
      %v911 = vsel %vm235, %v909, %v910
      %v912 = vrot.slane %v790, 1
      %v913 = vsel %vm235, %v910, %v912
      %v914 = vrot.slane %v791, 1
      %v915 = vrot.slane %v792, 1
      %v916 = vsel %vm235, %v914, %v915
      %v917 = vrot.slane %v793, 1
      %v918 = vsel %vm235, %v915, %v917
      %v919 = vrot.slane %v794, 1
      %v920 = vrot.slane %v795, 1
      %v921 = vsel %vm235, %v919, %v920
      %v922 = vrot.slane %v796, 1
      %v923 = vsel %vm235, %v920, %v922
      %v924 = vrot.slane %v797, 1
      %v925 = vrot.slane %v798, 1
      %v926 = vsel %vm235, %v924, %v925
      %v927 = vrot.slane %v799, 1
      %v928 = vsel %vm235, %v925, %v927
      %929 = vrot.lane.b32.xlu0 %v891, 28
      %v930 = vpop.permute.xlu0 %929
      %931 = vrot.lane.b32.xlu0 %v893, 28
      %v932 = vpop.permute.xlu0 %931
      %933 = vrot.lane.b32.xlu0 %v896, 28
      %v934 = vpop.permute.xlu0 %933
      %935 = vrot.lane.b32.xlu0 %v898, 28
      %v936 = vpop.permute.xlu0 %935
      %937 = vrot.lane.b32.xlu0 %v901, 28
      %v938 = vpop.permute.xlu0 %937
      %939 = vrot.lane.b32.xlu0 %v903, 28
      %v940 = vpop.permute.xlu0 %939
      %941 = vrot.lane.b32.xlu0 %v906, 28
      %v942 = vpop.permute.xlu0 %941
      %943 = vrot.lane.b32.xlu0 %v908, 28
      %v944 = vpop.permute.xlu0 %943
      %945 = vrot.lane.b32.xlu0 %v911, 28
      %v946 = vpop.permute.xlu0 %945
      %947 = vrot.lane.b32.xlu0 %v913, 28
      %v948 = vpop.permute.xlu0 %947
      %949 = vrot.lane.b32.xlu0 %v916, 28
      %v950 = vpop.permute.xlu0 %949
      %951 = vrot.lane.b32.xlu0 %v918, 28
      %v952 = vpop.permute.xlu0 %951
      %953 = vrot.lane.b32.xlu0 %v921, 28
      %v954 = vpop.permute.xlu0 %953
      %955 = vrot.lane.b32.xlu0 %v923, 28
      %v956 = vpop.permute.xlu0 %955
      %957 = vrot.lane.b32.xlu0 %v926, 28
      %v958 = vpop.permute.xlu0 %957
      %959 = vrot.lane.b32.xlu0 %v928, 28
      %v960 = vpop.permute.xlu0 %959
      %vm977 = vcmask 261344
      %978 = vst.msk [vmem:[#allocation2] sm:$0xff] %vm977, %v930
      %979 = vst.msk [vmem:[#allocation2 + $0x8] sm:$0xff] %vm977, %v932
      %980 = vst.msk [vmem:[#allocation2 + $0x10] sm:$0xff] %vm977, %v934
      %981 = vst.msk [vmem:[#allocation2 + $0x18] sm:$0xff] %vm977, %v936
      %982 = vst.msk [vmem:[#allocation2 + $0x20] sm:$0xff] %vm977, %v938
      %983 = vst.msk [vmem:[#allocation2 + $0x28] sm:$0xff] %vm977, %v940
      %984 = vst.msk [vmem:[#allocation2 + $0x30] sm:$0xff] %vm977, %v942
      %985 = vst.msk [vmem:[#allocation2 + $0x38] sm:$0xff] %vm977, %v944
      %986 = vst.msk [vmem:[#allocation2 + $0x40] sm:$0xff] %vm977, %v946
      %987 = vst.msk [vmem:[#allocation2 + $0x48] sm:$0xff] %vm977, %v948
      %988 = vst.msk [vmem:[#allocation2 + $0x50] sm:$0xff] %vm977, %v950
      %989 = vst.msk [vmem:[#allocation2 + $0x58] sm:$0xff] %vm977, %v952
      %990 = vst.msk [vmem:[#allocation2 + $0x60] sm:$0xff] %vm977, %v954
      %991 = vst.msk [vmem:[#allocation2 + $0x68] sm:$0xff] %vm977, %v956
      %992 = vst.msk [vmem:[#allocation2 + $0x70] sm:$0xff] %vm977, %v958
      %993 = vst.msk [vmem:[#allocation2 + $0x78] sm:$0xff] %vm977, %v960
      %v994 = vrot.slane %v776, 2
      %v995 = vrot.slane %v777, 2
      %v996 = vsel %vm341, %v994, %v995
      %v997 = vrot.slane %v778, 2
      %v998 = vsel %vm341, %v995, %v997
      %v999 = vrot.slane %v779, 2
      %v1000 = vrot.slane %v780, 2
      %v1001 = vsel %vm341, %v999, %v1000
      %v1002 = vrot.slane %v781, 2
      %v1003 = vsel %vm341, %v1000, %v1002
      %v1004 = vrot.slane %v782, 2
      %v1005 = vrot.slane %v783, 2
      %v1006 = vsel %vm341, %v1004, %v1005
      %v1007 = vrot.slane %v784, 2
      %v1008 = vsel %vm341, %v1005, %v1007
      %v1009 = vrot.slane %v785, 2
      %v1010 = vrot.slane %v786, 2
      %v1011 = vsel %vm341, %v1009, %v1010
      %v1012 = vrot.slane %v787, 2
      %v1013 = vsel %vm341, %v1010, %v1012
      %v1014 = vrot.slane %v788, 2
      %v1015 = vrot.slane %v789, 2
      %v1016 = vsel %vm341, %v1014, %v1015
      %v1017 = vrot.slane %v790, 2
      %v1018 = vsel %vm341, %v1015, %v1017
      %v1019 = vrot.slane %v791, 2
      %v1020 = vrot.slane %v792, 2
      %v1021 = vsel %vm341, %v1019, %v1020
      %v1022 = vrot.slane %v793, 2
      %v1023 = vsel %vm341, %v1020, %v1022
      %v1024 = vrot.slane %v794, 2
      %v1025 = vrot.slane %v795, 2
      %v1026 = vsel %vm341, %v1024, %v1025
      %v1027 = vrot.slane %v796, 2
      %v1028 = vsel %vm341, %v1025, %v1027
      %v1029 = vrot.slane %v797, 2
      %v1030 = vrot.slane %v798, 2
      %v1031 = vsel %vm341, %v1029, %v1030
      %v1032 = vrot.slane %v799, 2
      %v1033 = vsel %vm341, %v1030, %v1032
      %1034 = vrot.lane.b32.xlu0 %v996, 32
      %v1035 = vpop.permute.xlu0 %1034
      %1036 = vrot.lane.b32.xlu0 %v998, 32
      %v1037 = vpop.permute.xlu0 %1036
      %1038 = vrot.lane.b32.xlu0 %v1001, 32
      %v1039 = vpop.permute.xlu0 %1038
      %1040 = vrot.lane.b32.xlu0 %v1003, 32
      %v1041 = vpop.permute.xlu0 %1040
      %1042 = vrot.lane.b32.xlu0 %v1006, 32
      %v1043 = vpop.permute.xlu0 %1042
      %1044 = vrot.lane.b32.xlu0 %v1008, 32
      %v1045 = vpop.permute.xlu0 %1044
      %1046 = vrot.lane.b32.xlu0 %v1011, 32
      %v1047 = vpop.permute.xlu0 %1046
      %1048 = vrot.lane.b32.xlu0 %v1013, 32
      %v1049 = vpop.permute.xlu0 %1048
      %1050 = vrot.lane.b32.xlu0 %v1016, 32
      %v1051 = vpop.permute.xlu0 %1050
      %1052 = vrot.lane.b32.xlu0 %v1018, 32
      %v1053 = vpop.permute.xlu0 %1052
      %1054 = vrot.lane.b32.xlu0 %v1021, 32
      %v1055 = vpop.permute.xlu0 %1054
      %1056 = vrot.lane.b32.xlu0 %v1023, 32
      %v1057 = vpop.permute.xlu0 %1056
      %1058 = vrot.lane.b32.xlu0 %v1026, 32
      %v1059 = vpop.permute.xlu0 %1058
      %1060 = vrot.lane.b32.xlu0 %v1028, 32
      %v1061 = vpop.permute.xlu0 %1060
      %1062 = vrot.lane.b32.xlu0 %v1031, 32
      %v1063 = vpop.permute.xlu0 %1062
      %1064 = vrot.lane.b32.xlu0 %v1033, 32
      %v1065 = vpop.permute.xlu0 %1064
      %vm1082 = vcmask 294144
      %1083 = vst.msk [vmem:[#allocation2] sm:$0xff] %vm1082, %v1035
      %1084 = vst.msk [vmem:[#allocation2 + $0x8] sm:$0xff] %vm1082, %v1037
      %1085 = vst.msk [vmem:[#allocation2 + $0x10] sm:$0xff] %vm1082, %v1039
      %1086 = vst.msk [vmem:[#allocation2 + $0x18] sm:$0xff] %vm1082, %v1041
      %1087 = vst.msk [vmem:[#allocation2 + $0x20] sm:$0xff] %vm1082, %v1043
      %1088 = vst.msk [vmem:[#allocation2 + $0x28] sm:$0xff] %vm1082, %v1045
      %1089 = vst.msk [vmem:[#allocation2 + $0x30] sm:$0xff] %vm1082, %v1047
      %1090 = vst.msk [vmem:[#allocation2 + $0x38] sm:$0xff] %vm1082, %v1049
      %1091 = vst.msk [vmem:[#allocation2 + $0x40] sm:$0xff] %vm1082, %v1051
      %1092 = vst.msk [vmem:[#allocation2 + $0x48] sm:$0xff] %vm1082, %v1053
      %1093 = vst.msk [vmem:[#allocation2 + $0x50] sm:$0xff] %vm1082, %v1055
      %1094 = vst.msk [vmem:[#allocation2 + $0x58] sm:$0xff] %vm1082, %v1057
      %1095 = vst.msk [vmem:[#allocation2 + $0x60] sm:$0xff] %vm1082, %v1059
      %1096 = vst.msk [vmem:[#allocation2 + $0x68] sm:$0xff] %vm1082, %v1061
      %1097 = vst.msk [vmem:[#allocation2 + $0x70] sm:$0xff] %vm1082, %v1063
      %1098 = vst.msk [vmem:[#allocation2 + $0x78] sm:$0xff] %vm1082, %v1065
      %v1099 = vld [vmem:[#allocation2] sm:$0xff]
      %v1100 = vld [vmem:[#allocation2 + $0x8] sm:$0xff]
      %v1101 = vld [vmem:[#allocation2 + $0x10] sm:$0xff]
      %v1102 = vld [vmem:[#allocation2 + $0x18] sm:$0xff]
      %v1103 = vld [vmem:[#allocation2 + $0x20] sm:$0xff]
      %v1104 = vld [vmem:[#allocation2 + $0x28] sm:$0xff]
      %v1105 = vld [vmem:[#allocation2 + $0x30] sm:$0xff]
      %v1106 = vld [vmem:[#allocation2 + $0x38] sm:$0xff]
      %v1107 = vld [vmem:[#allocation2 + $0x40] sm:$0xff]
      %v1108 = vld [vmem:[#allocation2 + $0x48] sm:$0xff]
      %v1109 = vld [vmem:[#allocation2 + $0x50] sm:$0xff]
      %v1110 = vld [vmem:[#allocation2 + $0x58] sm:$0xff]
      %v1111 = vld [vmem:[#allocation2 + $0x60] sm:$0xff]
      %v1112 = vld [vmem:[#allocation2 + $0x68] sm:$0xff]
      %v1113 = vld [vmem:[#allocation2 + $0x70] sm:$0xff]
      %v1114 = vld [vmem:[#allocation2 + $0x78] sm:$0xff]
      %v1115 = vld [vmem:[%s1] sm:$0xff]
      %v1116 = vld [vmem:[%s1 + $0x8] sm:$0xff]
      %v1117 = vld [vmem:[%s1 + $0x10] sm:$0xff]
      %v1118 = vld [vmem:[%s1 + $0x18] sm:$0xff]
      %v1119 = vld [vmem:[%s1 + $0x20] sm:$0xf]
      %vm1120 = vcmask 293888
      %v1122 = vsel %vm1120, %v1099, 0
      %v1125 = vsel %vm1120, %v1100, 0
      %v1128 = vsel %vm1120, %v1101, 0
      %v1131 = vsel %vm1120, %v1102, 0
      %v1134 = vsel %vm1120, %v1103, 0
      %v1137 = vsel %vm1120, %v1104, 0
      %v1140 = vsel %vm1120, %v1105, 0
      %v1143 = vsel %vm1120, %v1106, 0
      %v1146 = vsel %vm1120, %v1107, 0
      %v1149 = vsel %vm1120, %v1108, 0
      %v1152 = vsel %vm1120, %v1109, 0
      %v1155 = vsel %vm1120, %v1110, 0
      %v1158 = vsel %vm1120, %v1111, 0
      %v1161 = vsel %vm1120, %v1112, 0
      %v1164 = vsel %vm1120, %v1113, 0
      %v1167 = vsel %vm1120, %v1114, 0
      %vm1169 = vcmask 1043456
      %v1171 = vsel %vm1169, %v1119, 0
      %1173 = vmatprep.subr.mxu0 0.0
      %1174 = vmatpush1.msra.mxu0 %v1115
      %1175 = vmatprep.subr.mxu0 0.0
      %1176 = vmatpush1.msra.mxu0 %v1116
      %1177 = vmatprep.subr.mxu0 0.0
      %1178 = vmatpush1.msra.mxu0 %v1117
      %1179 = vmatprep.subr.mxu0 0.0
      %1180 = vmatpush1.msra.mxu0 %v1118
      %1181 = vmatprep.subr.mxu0 0.0
      %1182 = vmatpush1.msra.mxu0 %v1171
      %1183 = vmatprep.subr.mxu0 0.0
      %1184 = vmatpush1.msra.mxu0 0.0
      %1185 = vmatprep.subr.mxu0 0.0
      %1186 = vmatpush1.msra.mxu0 0.0
      %1187 = vmatprep.subr.mxu0 0.0
      %1188 = vmatpush1.msra.mxu0 0.0
      %1189 = vmatprep.subr.mxu0 0.0
      %1190 = vmatpush1.msra.mxu0 0.0
      %1191 = vmatprep.subr.mxu0 0.0
      %1192 = vmatpush1.msra.mxu0 0.0
      %1193 = vmatprep.subr.mxu0 0.0
      %1194 = vmatpush1.msra.mxu0 0.0
      %1195 = vmatprep.subr.mxu0 0.0
      %1196 = vmatpush1.msra.mxu0 0.0
      %1197 = vmatprep.subr.mxu0 0.0
      %1198 = vmatpush1.msra.mxu0 0.0
      %1199 = vmatprep.subr.mxu0 0.0
      %1200 = vmatpush1.msra.mxu0 0.0
      %1201 = vmatprep.subr.mxu0 0.0
      %1202 = vmatpush1.msra.mxu0 0.0
      %1203 = vmatprep.subr.mxu0 0.0
      %1204 = vmatpush1.msra.mxu0 0.0
      %1205 = vmatprep.subr.mxu0 0.0
      %1206 = vmatpush1.msra.mxu0 0.0
      %1207 = vmatprep.subr.mxu0 0.0
      %1208 = vmatpush1.msra.mxu0 0.0
      %1209 = vmatprep.subr.mxu0 0.0
      %1210 = vmatpush1.msra.mxu0 0.0
      %1211 = vmatprep.subr.mxu0 0.0
      %1212 = vmatpush1.msra.mxu0 0.0
      %1213 = vmatprep.subr.mxu0 0.0
      %1214 = vmatpush1.msra.mxu0 0.0
      %1215 = vmatprep.subr.mxu0 0.0
      %1216 = vmatpush1.msra.mxu0 0.0
      %1217 = vmatprep.subr.mxu0 0.0
      %1218 = vmatpush1.msra.mxu0 0.0
      %1219 = vmatprep.subr.mxu0 0.0
      %1220 = vmatpush1.msra.mxu0 0.0
      %1221 = vmatprep.subr.mxu0 0.0
      %1222 = vmatpush1.msra.mxu0 0.0
      %1223 = vmatprep.subr.mxu0 0.0
      %1224 = vmatpush1.msra.mxu0 0.0
      %1225 = vmatprep.subr.mxu0 0.0
      %1226 = vmatpush1.msra.mxu0 0.0
      %1227 = vmatprep.subr.mxu0 0.0
      %1228 = vmatpush1.msra.mxu0 0.0
      %1229 = vmatprep.subr.mxu0 0.0
      %1230 = vmatpush1.msra.mxu0 0.0
      %1231 = vmatprep.subr.mxu0 0.0
      %1232 = vmatpush1.msra.mxu0 0.0
      %1233 = vmatprep.subr.mxu0 0.0
      %1234 = vmatpush1.msra.mxu0 0.0
      %1235 = vmatprep.subr.mxu0 0.0
      %1236 = vmatpush1.msra.mxu0 0.0
      %1237 = vmatprep.mubr.f32.mxu0 0.0
      %1238 = vmatmul.mubr.f32.gmra.mrb[0].mxu0 %v1122
      %v1239 = vpop.f32.mrb[0].mxu0
      %v1240 = vadd.f32 0.0, %v1239
      %v1241 = vpop.f32.mrb[0].mxu0
      %1242 = vmatprep.mubr.f32.mxu0 0.0
      %1243 = vmatmul.mubr.f32.gmra.mrb[0].mxu0 %v1125
      %v1244 = vpop.f32.mrb[0].mxu0
      %v1245 = vadd.f32 0.0, %v1244
      %v1246 = vpop.f32.mrb[0].mxu0
      %1247 = vmatprep.mubr.f32.mxu0 0.0
      %1248 = vmatmul.mubr.f32.gmra.mrb[0].mxu0 %v1128
      %v1249 = vpop.f32.mrb[0].mxu0
      %v1250 = vadd.f32 0.0, %v1249
      %v1251 = vpop.f32.mrb[0].mxu0
      %1252 = vmatprep.mubr.f32.mxu0 0.0
      %1253 = vmatmul.mubr.f32.gmra.mrb[0].mxu0 %v1131
      %v1254 = vpop.f32.mrb[0].mxu0
      %v1255 = vadd.f32 0.0, %v1254
      %v1256 = vpop.f32.mrb[0].mxu0
      %1257 = vmatprep.mubr.f32.mxu0 0.0
      %1258 = vmatmul.mubr.f32.gmra.mrb[0].mxu0 %v1134
      %v1259 = vpop.f32.mrb[0].mxu0
      %v1260 = vadd.f32 0.0, %v1259
      %v1261 = vpop.f32.mrb[0].mxu0
      %1262 = vmatprep.mubr.f32.mxu0 0.0
      %1263 = vmatmul.mubr.f32.gmra.mrb[0].mxu0 %v1137
      %v1264 = vpop.f32.mrb[0].mxu0
      %v1265 = vadd.f32 0.0, %v1264
      %v1266 = vpop.f32.mrb[0].mxu0
      %1267 = vmatprep.mubr.f32.mxu0 0.0
      %1268 = vmatmul.mubr.f32.gmra.mrb[0].mxu0 %v1140
      %v1269 = vpop.f32.mrb[0].mxu0
      %v1270 = vadd.f32 0.0, %v1269
      %v1271 = vpop.f32.mrb[0].mxu0
      %1272 = vmatprep.mubr.f32.mxu0 0.0
      %1273 = vmatmul.mubr.f32.gmra.mrb[0].mxu0 %v1143
      %v1274 = vpop.f32.mrb[0].mxu0
      %v1275 = vadd.f32 0.0, %v1274
      %v1276 = vpop.f32.mrb[0].mxu0
      %1277 = vmatprep.mubr.f32.mxu0 0.0
      %1278 = vmatmul.mubr.f32.gmra.mrb[0].mxu0 %v1146
      %v1279 = vpop.f32.mrb[0].mxu0
      %v1280 = vadd.f32 0.0, %v1279
      %v1281 = vpop.f32.mrb[0].mxu0
      %1282 = vmatprep.mubr.f32.mxu0 0.0
      %1283 = vmatmul.mubr.f32.gmra.mrb[0].mxu0 %v1149
      %v1284 = vpop.f32.mrb[0].mxu0
      %v1285 = vadd.f32 0.0, %v1284
      %v1286 = vpop.f32.mrb[0].mxu0
      %1287 = vmatprep.mubr.f32.mxu0 0.0
      %1288 = vmatmul.mubr.f32.gmra.mrb[0].mxu0 %v1152
      %v1289 = vpop.f32.mrb[0].mxu0
      %v1290 = vadd.f32 0.0, %v1289
      %v1291 = vpop.f32.mrb[0].mxu0
      %1292 = vmatprep.mubr.f32.mxu0 0.0
      %1293 = vmatmul.mubr.f32.gmra.mrb[0].mxu0 %v1155
      %v1294 = vpop.f32.mrb[0].mxu0
      %v1295 = vadd.f32 0.0, %v1294
      %v1296 = vpop.f32.mrb[0].mxu0
      %1297 = vmatprep.mubr.f32.mxu0 0.0
      %1298 = vmatmul.mubr.f32.gmra.mrb[0].mxu0 %v1158
      %v1299 = vpop.f32.mrb[0].mxu0
      %v1300 = vadd.f32 0.0, %v1299
      %v1301 = vpop.f32.mrb[0].mxu0
      %1302 = vmatprep.mubr.f32.mxu0 0.0
      %1303 = vmatmul.mubr.f32.gmra.mrb[0].mxu0 %v1161
      %v1304 = vpop.f32.mrb[0].mxu0
      %v1305 = vadd.f32 0.0, %v1304
      %v1306 = vpop.f32.mrb[0].mxu0
      %1307 = vmatprep.mubr.f32.mxu0 0.0
      %1308 = vmatmul.mubr.f32.gmra.mrb[0].mxu0 %v1164
      %v1309 = vpop.f32.mrb[0].mxu0
      %v1310 = vadd.f32 0.0, %v1309
      %v1311 = vpop.f32.mrb[0].mxu0
      %1312 = vmatprep.mubr.f32.mxu0 0.0
      %1313 = vmatmul.mubr.f32.gmra.mrb[0].mxu0 %v1167
      %v1314 = vpop.f32.mrb[0].mxu0
      %v1315 = vadd.f32 0.0, %v1314
      %v1316 = vpop.f32.mrb[0].mxu0
      %1317 = vdwg.mxu0
      %1318 = vst [vmem:[%s165] sm:$0xff] %v1240
      %1319 = vst [vmem:[%s165 + $0x8] sm:$0xff] %v1245
      %1320 = vst [vmem:[%s165 + $0x10] sm:$0xff] %v1250
      %1321 = vst [vmem:[%s165 + $0x18] sm:$0xff] %v1255
      %1322 = vst [vmem:[%s165 + $0x20] sm:$0xff] %v1260
      %1323 = vst [vmem:[%s165 + $0x28] sm:$0xff] %v1265
      %1324 = vst [vmem:[%s165 + $0x30] sm:$0xff] %v1270
      %1325 = vst [vmem:[%s165 + $0x38] sm:$0xff] %v1275
      %1326 = vst [vmem:[%s165 + $0x40] sm:$0xff] %v1280
      %1327 = vst [vmem:[%s165 + $0x48] sm:$0xff] %v1285
      %1328 = vst [vmem:[%s165 + $0x50] sm:$0xff] %v1290
      %1329 = vst [vmem:[%s165 + $0x58] sm:$0xff] %v1295
      %1330 = vst [vmem:[%s165 + $0x60] sm:$0xff] %v1300
      %1331 = vst [vmem:[%s165 + $0x68] sm:$0xff] %v1305
      %1332 = vst [vmem:[%s165 + $0x70] sm:$0xff] %v1310
      %1333 = vst [vmem:[%s165 + $0x78] sm:$0xff] %v1315
      %s1334 = smul.u32 16, %s18
      %p1335 = scmp.lt.s32.totalorder %s17, 1
      %s1336 = scalar_select %p1335, %s17, 1
      %p1337 = scmp.lt.s32.totalorder %s1334, 31
      %s1338 = scalar_select %p1337, %s1334, 31
      %s1339 = smul.addr %s1336, 32
      %s1340 = sadd.s32 %s1338, %s1339
      %s1341 = smul.addr %s1340, 8
      %s1342 = scalar_lea.vmem %s2, %s1341
      // Predicated region
      $region29: #{upsample_x4.1} parent=27 // pred_check
        %p1343 = pneg %p92
      $region30: #{upsample_x4.1} parent=27 // pred_check_branch
        %1345 = sbr.rel (%p1343) target = $region32
      $region31: #{upsample_x4.1} parent=27 // pred_region
        %s1346 = smul.u32 16, %s18
      $region32: #{upsample_x4.1} parent=27 // pred_fallthru
        _
    $region28: #{upsample_x4.1} parent=5 // pred_fallthru
      _
    %p1347 = scmp.le.s32.totalorder 2, %s8
    // Predicated region
    $region33: #{upsample_x4.1} parent=5 // pred_check
      %p1348 = pneg %p1347
    $region34: #{upsample_x4.1} parent=5 // pred_check_branch
      %1350 = sbr.rel (%p1348) target = $region36
    $region35: #{upsample_x4.1} parent=5 // pred_region
      %s1351 = ssub.s32 %s8, 2
      // Predicated region
      $region37: #{upsample_x4.1} parent=35 // pred_check
        %p1352 = pneg %p98
      $region38: #{upsample_x4.1} parent=35 // pred_check_branch
        %1354 = sbr.rel (%p1352) target = $region40
      $region39: #{upsample_x4.1} parent=35 // pred_region
        %s1355 = smul.u32 16, %s20
        %p1356 = scmp.lt.s32.totalorder %s19, 1
        %s1357 = scalar_select %p1356, %s19, 1
        %p1358 = scmp.lt.s32.totalorder %s1355, 31
        %s1359 = scalar_select %p1358, %s1355, 31
        %s1360 = smul.addr %s1357, 32
        %s1361 = sadd.s32 %s1359, %s1360
        %s1362 = smul.addr %s1361, 8
        %s1363 = scalar_lea.vmem %s2, %s1362
      $region40: #{upsample_x4.1} parent=35 // pred_fallthru
        _
    $region36: #{upsample_x4.1} parent=5 // pred_fallthru
      _
  $region6: #{upsample_x4.1} parent=0 // loop_footer
    %s12 = sadd.s32 1, %s8
  $region7: #{upsample_x4.1} parent=0 // loop_footer_branch
    %7 = sbr.rel target = $region3
  $region8: #{upsample_x4.1} parent=0 // loop_exit
    _

</llo_original>
